<compile_context>
chip_gen: v7x
topology: tpu7x:2x2x1
jax: 0.10.0
libtpu: 0.0.40
codegen_flags: <defaults>
</compile_context>

<pallas_src>
import jax
import jax.numpy as jnp
from jax.experimental import pallas as pl
from jax.experimental.pallas import tpu as pltpu


def attention_kernel(enc_ref, w_e_ref, projb_ref, v_ref, out_ref):
    # enc_ref   : (B, S, H)   encoder outputs, natural layout (H contracts on MXU)
    # w_e_ref   : (H, H)      attn.weight[:, H:]  (out_features, in_features)
    # projb_ref : (B, 1, H)   W_h @ hidden^T + bias, precomputed once per batch elem
    # v_ref     : (1, 1, H)   V parameter
    # out_ref   : (B, S)      softmax attention weights (lane-dense over S)
    B, S, H = enc_ref.shape
    Ho = w_e_ref.shape[0]

    # Encoder-half projection: one batched MXU contraction over the feature axis
    # (flash-attention style 'b..h,b..h' contraction; weight broadcast over B).
    w_e_b = jnp.broadcast_to(w_e_ref[...][None], (B, Ho, H))
    proj_e = jnp.einsum("bsh,boh->bso", enc_ref[...], w_e_b,
                        preferred_element_type=jnp.float32)        # (B, S, Ho) f32

    # x = tanh(enc @ W_e^T + (hidden @ W_h^T + b)); the hidden projection is
    # computed once per batch element and broadcast over the S sublanes here.
    x = jnp.tanh(proj_e + projb_ref[...])                          # (B, S, Ho) f32

    # Alignment scores x . V: VPU broadcast-multiply + lane (XLU) reduce.
    scores = jnp.sum(x * v_ref[...], axis=-1)                      # (B, S) f32

    # Single vectorized softmax over the sequence axis for all batches at once.
    # Exact divide: EUP approx reciprocal buys no wall-clock here, costs accuracy.
    m = jnp.max(scores, axis=-1, keepdims=True)                    # (B, 1)
    e = jnp.exp(scores - m)                                        # (B, S)
    denom = jnp.sum(e, axis=-1, keepdims=True)                     # (B, 1)
    out_ref[...] = (e / denom).astype(out_ref.dtype)               # one lane-dense store


def attention_forward(hidden, encoder_outputs, attn_weight, attn_bias, V,
                      *, mxu_dtype=jnp.float32):
    """hidden: (B, H); encoder_outputs: (B, S, H); attn_weight: (H, 2H);
    attn_bias: (H,); V: (H,).  Returns attention weights (B, 1, S) in f32.

    mxu_dtype: dtype of the MXU operands (use jnp.bfloat16 on v6e/v7x per the
    perf review); accumulation and all elementwise math stay in float32."""
    B, S, H = encoder_outputs.shape

    # Static split of Linear(2H -> H): first H input features act on `hidden`,
    # last H on `encoder_outputs` (matches torch.cat([hidden, enc], dim=2)).
    w_h = attn_weight[:, :H]
    w_e = attn_weight[:, H:].astype(mxu_dtype)

    # Hidden-half projection + bias: tiny (B,H)x(H,H) dot, once per call (not once
    # per S as the repeat+concat formulation did).  XLA fuses dot + add + reshape;
    # no activation repeat/concat HLOs remain in the wrapper.
    proj_h = jnp.dot(hidden.astype(mxu_dtype), w_h.T.astype(mxu_dtype),
                     precision=jax.lax.Precision.HIGHEST,
                     preferred_element_type=jnp.float32)            # (B, H)
    proj_b = (proj_h + attn_bias.astype(jnp.float32)).reshape(B, 1, H)

    enc = encoder_outputs.astype(mxu_dtype)
    v3 = V.astype(jnp.float32).reshape(1, 1, H)

    def nbytes(a):
        return int(a.size) * a.dtype.itemsize

    cost = pl.CostEstimate(
        flops=2 * B * S * H * H + 4 * B * S * H + 8 * B * S,
        transcendentals=B * S * H + B * S,              # tanh + exp
        bytes_accessed=nbytes(enc) + nbytes(w_e) + nbytes(proj_b) + nbytes(v3)
                       + 4 * B * S,
    )

    out = pl.pallas_call(
        attention_kernel,
        out_shape=jax.ShapeDtypeStruct((B, S), jnp.float32),
        in_specs=[pl.BlockSpec(memory_space=pltpu.MemorySpace.VMEM)] * 4,
        out_specs=pl.BlockSpec(memory_space=pltpu.MemorySpace.VMEM),
        cost_estimate=cost,
    )(enc, w_e, proj_b, v3)

    # (B, S) -> (B, 1, S): metadata-only reshape, matches the module's return.
    return out.reshape(B, 1, S)


def attention_reference(hidden, encoder_outputs, attn_weight, attn_bias, V):
    """Pure-JAX reference mirroring the PyTorch forward pass (f32, high precision)."""
    B, S, H = encoder_outputs.shape
    hid = jnp.broadcast_to(hidden[:, None, :], (B, S, H))
    cat = jnp.concatenate([hid, encoder_outputs], axis=2)            # (B, S, 2H)
    x = jnp.tanh(jnp.einsum("bsk,hk->bsh", cat, attn_weight,
                            precision=jax.lax.Precision.HIGHEST) + attn_bias)
    scores = jnp.einsum("bsh,h->bs", x, V,
                        precision=jax.lax.Precision.HIGHEST)         # (B, S)
    w = jax.nn.softmax(scores, axis=1)
    return w[:, None, :]                                             # (B, 1, S)


if __name__ == "__main__":
    B, S, H = 2, 8, 32                                  # batch, stroke_seq_len, hidden_dim
    key = jax.random.PRNGKey(0)
    k1, k2, k3, k4, k5 = jax.random.split(key, 5)

    hidden = jax.random.normal(k1, (B, H), jnp.float32)
    encoder_outputs = jax.random.normal(k2, (B, S, H), jnp.float32)

    # Deterministic synthetic parameter init (shapes from the module's __init__):
    # attn = nn.Linear(2H, H) -> weight (H, 2H), bias (H,);  V = randn(H)/sqrt(H)
    bound = 1.0 / (2 * H) ** 0.5
    attn_weight = jax.random.uniform(k3, (H, 2 * H), jnp.float32, -bound, bound)
    attn_bias = jax.random.uniform(k4, (H,), jnp.float32, -bound, bound)
    V = jax.random.normal(k5, (H,), jnp.float32) / (H ** 0.5)

    ref = attention_reference(hidden, encoder_outputs, attn_weight, attn_bias, V)

    # Default f32 MXU operands: strict correctness check (exact softmax divide).
    out = attention_forward(hidden, encoder_outputs, attn_weight, attn_bias, V)
    out = jax.block_until_ready(out)
    assert out.shape == (B, 1, S), out.shape
    assert jnp.allclose(jnp.sum(out, axis=-1), 1.0, atol=1e-5), "softmax rows must sum to 1"
    assert jnp.allclose(out, ref, atol=5e-4, rtol=5e-4), "mismatch vs reference (f32)"

    # bf16 MXU operands (v6e/v7x-recommended mode); elementwise math stays f32.
    # Looser tolerance reflects bf16 operand rounding only.
    out_bf16 = attention_forward(hidden, encoder_outputs, attn_weight, attn_bias, V,
                                 mxu_dtype=jnp.bfloat16)
    out_bf16 = jax.block_until_ready(out_bf16)
    assert out_bf16.shape == (B, 1, S), out_bf16.shape
    assert jnp.allclose(out_bf16, ref, atol=5e-2, rtol=5e-2), "mismatch vs reference (bf16 MXU)"

    print("KERNEL_OK")
</pallas_src>

<mosaic_0001>
module attributes {stable_mosaic.version = 11 : i64} {
  func.func @attention_kernel(%arg0: memref<2x8x32xf32, #tpu.memory_space<vmem>>, %arg1: memref<32x32xf32, #tpu.memory_space<vmem>>, %arg2: memref<2x1x32xf32, #tpu.memory_space<vmem>>, %arg3: memref<1x1x32xf32, #tpu.memory_space<vmem>>, %arg4: memref<2x8xf32, #tpu.memory_space<vmem>>) attributes {dimension_semantics = [], scalar_prefetch = 0 : i64, scratch_operands = 0 : i64, tpu.core_type = #tpu.core_type<tc>} {
    %c0 = arith.constant 0 : index
    %c0_0 = arith.constant 0 : index
    %0 = vector.load %arg1[%c0, %c0_0] : memref<32x32xf32, #tpu.memory_space<vmem>>, vector<32x32xf32>
    %1 = vector.shape_cast %0 : vector<32x32xf32> to vector<1x32x32xf32>
    %2 = vector.shape_cast %1 : vector<1x32x32xf32> to vector<1x32x32xf32>
    %3 = vector.broadcast %2 : vector<1x32x32xf32> to vector<2x32x32xf32>
    %c0_1 = arith.constant 0 : index
    %c0_2 = arith.constant 0 : index
    %c0_3 = arith.constant 0 : index
    %4 = vector.load %arg0[%c0_1, %c0_2, %c0_3] : memref<2x8x32xf32, #tpu.memory_space<vmem>>, vector<2x8x32xf32>
    "tpu.trace_start"() <{level = 10 : i32, message = "bsh,boh->bso"}> : () -> ()
    %cst = arith.constant dense<0.000000e+00> : vector<2x8x32xf32>
    %5 = tpu.matmul %4, %3, %cst {dimension_numbers = #tpu.dot_dimension_numbers<[2], [2], [1], [1], [0, 0, 0, 1, 1, 1], [0], [0]>} : vector<2x8x32xf32>, vector<2x32x32xf32>, vector<2x8x32xf32> -> vector<2x8x32xf32>
    "tpu.trace_stop"() : () -> ()
    %c0_4 = arith.constant 0 : index
    %c0_5 = arith.constant 0 : index
    %c0_6 = arith.constant 0 : index
    %6 = vector.load %arg2[%c0_4, %c0_5, %c0_6] : memref<2x1x32xf32, #tpu.memory_space<vmem>>, vector<2x1x32xf32>
    %7 = vector.broadcast %6 : vector<2x1x32xf32> to vector<2x8x32xf32>
    %8 = arith.addf %5, %7 : vector<2x8x32xf32>
    %9 = math.tanh %8 : vector<2x8x32xf32>
    %c0_7 = arith.constant 0 : index
    %c0_8 = arith.constant 0 : index
    %c0_9 = arith.constant 0 : index
    %10 = vector.load %arg3[%c0_7, %c0_8, %c0_9] : memref<1x1x32xf32, #tpu.memory_space<vmem>>, vector<1x1x32xf32>
    %11 = vector.broadcast %10 : vector<1x1x32xf32> to vector<2x8x32xf32>
    %12 = arith.mulf %9, %11 : vector<2x8x32xf32>
    %cst_10 = arith.constant dense<0.000000e+00> : vector<2x8xf32>
    %13 = vector.multi_reduction <add>, %12, %cst_10 [2] : vector<2x8x32xf32> to vector<2x8xf32>
    %cst_11 = arith.constant dense<0xFF800000> : vector<2xf32>
    %14 = vector.multi_reduction <maximumf>, %13, %cst_11 [1] : vector<2x8xf32> to vector<2xf32>
    %15 = vector.shape_cast %14 : vector<2xf32> to vector<2x1xf32>
    %16 = vector.broadcast %15 : vector<2x1xf32> to vector<2x8xf32>
    %17 = arith.subf %13, %16 : vector<2x8xf32>
    %18 = math.exp %17 : vector<2x8xf32>
    %cst_12 = arith.constant dense<0.000000e+00> : vector<2xf32>
    %19 = vector.multi_reduction <add>, %18, %cst_12 [1] : vector<2x8xf32> to vector<2xf32>
    %20 = vector.shape_cast %19 : vector<2xf32> to vector<2x1xf32>
    %21 = vector.broadcast %20 : vector<2x1xf32> to vector<2x8xf32>
    %22 = arith.divf %18, %21 : vector<2x8xf32>
    %c0_13 = arith.constant 0 : index
    %c0_14 = arith.constant 0 : index
    %23 = vector.load %arg4[%c0_13, %c0_14] : memref<2x8xf32, #tpu.memory_space<vmem>>, vector<2x8xf32>
    tpu.vector_store %arg4[%c0_13, %c0_14], %22 {strides = array<i32>} : memref<2x8xf32, #tpu.memory_space<vmem>>, vector<2x8xf32>,
    return
  }
}

</mosaic_0001>

<llo_original>
// kernel: tpu_custom_call.1
$region0: #{tpu_custom_call.1}
  #allocation0 [shape = 'u32[]', space=smem, size = 0x4, offset = 0x4, fixed_abs, tag = 'smem constant byte address 0x4 - core index']
  #allocation1 [shape = 'u32[144,128]{1,0:T(1,128)}', space=vmem, size = 0x12000, scoped, tag = 'internal scratch']
  %s0 = inlined_call_operand.hbm [shape: f32[2,8,32], index: 0, kind: input, shape index: {}]
  %s1 = inlined_call_operand.hbm [shape: f32[32,32], index: 1, kind: input, shape index: {}]
  %s2 = inlined_call_operand.vmem [shape: f32[2,1,32], index: 2, kind: input, shape index: {}]
  %s3 = inlined_call_operand.vmem [shape: f32[1,1,32], index: 3, kind: input, shape index: {}]
  %s4 = inlined_call_operand.hbm [shape: f32[2,8], index: 4, kind: output, shape index: {}]
  %s5 = sld [smem:[#allocation0]]
  $region34: #{tpu_custom_call.1} parent=0
    _
  %s7 = ssub.s32 1, %s5
  %s8 = scalar_select 0, %s7, %s5
  $region1: #{tpu_custom_call.1} parent=0
    #allocation2 [shape = 'u8[8192]{0}', space=vmem, size = 0x2000, scoped, tag = 'input window, operand 0, single buffered']
    #allocation3 [shape = 's32[1]{0}', space=sflag, size = 0x4, scoped, tag = 'scoped memory for tpu_custom_call.1']
    #allocation4 [shape = 's32[1]{0}', space=sflag, size = 0x4, scoped, tag = 'scoped memory for tpu_custom_call.1']
    #allocation5 [shape = 'u8[16384]{0}', space=vmem, size = 0x4000, scoped, tag = 'input window, operand 1, single buffered']
    #allocation6 [shape = 's32[1]{0}', space=sflag, size = 0x4, scoped, tag = 'scoped memory for tpu_custom_call.1']
    #allocation7 [shape = 'u8[1024]{0}', space=vmem, size = 0x400, scoped, tag = 'output window, operand 0, single buffered']
    %9 = vsyncpa [#allocation3], 0
    %10 = vsyncpa [#allocation6], 0
    %11 = vsyncpa [#allocation4], 0
    // Predicated region
    $region2: #{tpu_custom_call.1} parent=1 // pred_check
      _
    $region3: #{tpu_custom_call.1} parent=1 // pred_check_branch
      %13 = sbr.rel (0) target = $region5
    $region4: #{tpu_custom_call.1} parent=1 // pred_region
      %s15 = ssub.s32 256, 256
      %16 = vsyncadd [#allocation3], %s15
      %s17 = sshll.u32 [#allocation2], 4
      %s18 = int_to_ptr.vmem [resolvable:$true] %s17
      %23 = dma.hbm_to_vmem [thread:$0]  %s0, 256, %s18, [#allocation3], 128, 128, 8
    $region5: #{tpu_custom_call.1} parent=1 // pred_fallthru
      _
    // Predicated region
    $region6: #{tpu_custom_call.1} parent=1 // pred_check
      _
    $region7: #{tpu_custom_call.1} parent=1 // pred_check_branch
      %25 = sbr.rel (0) target = $region9
    $region8: #{tpu_custom_call.1} parent=1 // pred_region
      %s27 = ssub.s32 512, 512
      %28 = vsyncadd [#allocation6], %s27
      %s29 = sshll.u32 [#allocation5], 4
      %s30 = int_to_ptr.vmem [resolvable:$true] %s29
      %35 = dma.hbm_to_vmem [thread:$0]  %s1, 512, %s30, [#allocation6], 128, 128, 8
    $region9: #{tpu_custom_call.1} parent=1 // pred_fallthru
      _
    // Predicated region
    $region10: #{tpu_custom_call.1} parent=1 // pred_check
      _
    $region11: #{tpu_custom_call.1} parent=1 // pred_check_branch
      %37 = sbr.rel (0) target = $region13
    $region12: #{tpu_custom_call.1} parent=1 // pred_region
      _
    $region13: #{tpu_custom_call.1} parent=1 // pred_fallthru
      _
    // Predicated region
    $region14: #{tpu_custom_call.1} parent=1 // pred_check
      _
    $region15: #{tpu_custom_call.1} parent=1 // pred_check_branch
      %39 = sbr.rel (0) target = $region17
    $region16: #{tpu_custom_call.1} parent=1 // pred_region
      _
    $region17: #{tpu_custom_call.1} parent=1 // pred_fallthru
      _
    // Predicated region
    $region18: #{tpu_custom_call.1} parent=1 // pred_check
      _
    $region19: #{tpu_custom_call.1} parent=1 // pred_check_branch
      %41 = sbr.rel (0) target = $region21
    $region20: #{tpu_custom_call.1} parent=1 // pred_region
      %42 = dma.done [#allocation3], 256
    $region21: #{tpu_custom_call.1} parent=1 // pred_fallthru
      _
    // Predicated region
    $region22: #{tpu_custom_call.1} parent=1 // pred_check
      _
    $region23: #{tpu_custom_call.1} parent=1 // pred_check_branch
      %44 = sbr.rel (0) target = $region25
    $region24: #{tpu_custom_call.1} parent=1 // pred_region
      %45 = dma.done [#allocation6], 512
    $region25: #{tpu_custom_call.1} parent=1 // pred_fallthru
      _
    %v46 = vld [vmem:[#allocation5] sm:$0xff]
    %v47 = vld [vmem:[#allocation5 + $0x8] sm:$0xff]
    %v48 = vld [vmem:[#allocation5 + $0x10] sm:$0xff]
    %v49 = vld [vmem:[#allocation5 + $0x18] sm:$0xff]
    %v50 = vld [vmem:[#allocation2] sm:$0xff]
    %v51 = vld [vmem:[#allocation2 + $0x8] sm:$0xff]
    %v52 = vld [vmem:[%s2] sm:$0x1]
    %v53 = vld [vmem:[%s2 + $0x1] sm:$0x1]
    %v56 = vlaneseq
    %v57 = vshrl.u32 %v56, 7
    %v58 = vsub.s32 0, %v57
    %v59 = vrot.slane %v52, %v58
    %v60 = vlaneseq
    %v61 = vshrl.u32 %v60, 7
    %v62 = vsub.s32 0, %v61
    %v63 = vrot.slane %v53, %v62
    %vm66 = vcmask 261120
    %v68 = vsel %vm66, %v50, 0
    %v71 = vsel %vm66, %v46, 0
    %v74 = vsel %vm66, %v47, 0
    %v77 = vsel %vm66, %v48, 0
    %v80 = vsel %vm66, %v49, 0
    %82 = vmatprep.subr.mxu0 0.0
    %83 = vmatpush1.xpose.msra.mxu0 %v71
    %84 = vmatprep.subr.mxu0 0.0
    %85 = vmatpush1.xpose.msra.mxu0 %v74
    %86 = vmatprep.subr.mxu0 0.0
    %87 = vmatpush1.xpose.msra.mxu0 %v77
    %88 = vmatprep.subr.mxu0 0.0
    %89 = vmatpush1.xpose.msra.mxu0 %v80
    %90 = vmatprep.subr.mxu0 0.0
    %91 = vmatpush1.xpose.msra.mxu0 0.0
    %92 = vmatprep.subr.mxu0 0.0
    %93 = vmatpush1.xpose.msra.mxu0 0.0
    %94 = vmatprep.subr.mxu0 0.0
    %95 = vmatpush1.xpose.msra.mxu0 0.0
    %96 = vmatprep.subr.mxu0 0.0
    %97 = vmatpush1.xpose.msra.mxu0 0.0
    %98 = vmatprep.subr.mxu0 0.0
    %99 = vmatpush1.xpose.msra.mxu0 0.0
    %100 = vmatprep.subr.mxu0 0.0
    %101 = vmatpush1.xpose.msra.mxu0 0.0
    %102 = vmatprep.subr.mxu0 0.0
    %103 = vmatpush1.xpose.msra.mxu0 0.0
    %104 = vmatprep.subr.mxu0 0.0
    %105 = vmatpush1.xpose.msra.mxu0 0.0
    %106 = vmatprep.subr.mxu0 0.0
    %107 = vmatpush1.xpose.msra.mxu0 0.0
    %108 = vmatprep.subr.mxu0 0.0
    %109 = vmatpush1.xpose.msra.mxu0 0.0
    %110 = vmatprep.subr.mxu0 0.0
    %111 = vmatpush1.xpose.msra.mxu0 0.0
    %112 = vmatprep.subr.mxu0 0.0
    %113 = vmatpush1.xpose.msra.mxu0 0.0
    %114 = vmatprep.subr.mxu0 0.0
    %115 = vmatpush1.xpose.msra.mxu0 0.0
    %116 = vmatprep.subr.mxu0 0.0
    %117 = vmatpush1.xpose.msra.mxu0 0.0
    %118 = vmatprep.subr.mxu0 0.0
    %119 = vmatpush1.xpose.msra.mxu0 0.0
    %120 = vmatprep.subr.mxu0 0.0
    %121 = vmatpush1.xpose.msra.mxu0 0.0
    %122 = vmatprep.subr.mxu0 0.0
    %123 = vmatpush1.xpose.msra.mxu0 0.0
    %124 = vmatprep.subr.mxu0 0.0
    %125 = vmatpush1.xpose.msra.mxu0 0.0
    %126 = vmatprep.subr.mxu0 0.0
    %127 = vmatpush1.xpose.msra.mxu0 0.0
    %128 = vmatprep.subr.mxu0 0.0
    %129 = vmatpush1.xpose.msra.mxu0 0.0
    %130 = vmatprep.subr.mxu0 0.0
    %131 = vmatpush1.xpose.msra.mxu0 0.0
    %132 = vmatprep.subr.mxu0 0.0
    %133 = vmatpush1.xpose.msra.mxu0 0.0
    %134 = vmatprep.subr.mxu0 0.0
    %135 = vmatpush1.xpose.msra.mxu0 0.0
    %136 = vmatprep.subr.mxu0 0.0
    %137 = vmatpush1.xpose.msra.mxu0 0.0
    %138 = vmatprep.subr.mxu0 0.0
    %139 = vmatpush1.xpose.msra.mxu0 0.0
    %140 = vmatprep.subr.mxu0 0.0
    %141 = vmatpush1.xpose.msra.mxu0 0.0
    %142 = vmatprep.subr.mxu0 0.0
    %143 = vmatpush1.xpose.msra.mxu0 0.0
    %144 = vmatprep.subr.mxu0 0.0
    %145 = vmatpush1.xpose.msra.mxu0 0.0
    %146 = vmatprep.mubr.f32.mxu0 0.0
    %147 = vmatmul.mubr.f32.gmra.mrb[0].mxu0 %v68
    %v148 = vpop.f32.mrb[0].mxu0
    %v149 = vadd.f32 %v59, %v148
    %v150 = vpop.f32.mrb[0].mxu0
    %151 = vdwg.mxu0
    %v153 = vsel %vm66, %v51, 0
    %155 = vmatprep.subr.mxu0 0.0
    %156 = vmatpush1.xpose.msra.mxu0 %v71
    %157 = vmatprep.subr.mxu0 0.0
    %158 = vmatpush1.xpose.msra.mxu0 %v74
    %159 = vmatprep.subr.mxu0 0.0
    %160 = vmatpush1.xpose.msra.mxu0 %v77
    %161 = vmatprep.subr.mxu0 0.0
    %162 = vmatpush1.xpose.msra.mxu0 %v80
    %163 = vmatprep.subr.mxu0 0.0
    %164 = vmatpush1.xpose.msra.mxu0 0.0
    %165 = vmatprep.subr.mxu0 0.0
    %166 = vmatpush1.xpose.msra.mxu0 0.0
    %167 = vmatprep.subr.mxu0 0.0
    %168 = vmatpush1.xpose.msra.mxu0 0.0
    %169 = vmatprep.subr.mxu0 0.0
    %170 = vmatpush1.xpose.msra.mxu0 0.0
    %171 = vmatprep.subr.mxu0 0.0
    %172 = vmatpush1.xpose.msra.mxu0 0.0
    %173 = vmatprep.subr.mxu0 0.0
    %174 = vmatpush1.xpose.msra.mxu0 0.0
    %175 = vmatprep.subr.mxu0 0.0
    %176 = vmatpush1.xpose.msra.mxu0 0.0
    %177 = vmatprep.subr.mxu0 0.0
    %178 = vmatpush1.xpose.msra.mxu0 0.0
    %179 = vmatprep.subr.mxu0 0.0
    %180 = vmatpush1.xpose.msra.mxu0 0.0
    %181 = vmatprep.subr.mxu0 0.0
    %182 = vmatpush1.xpose.msra.mxu0 0.0
    %183 = vmatprep.subr.mxu0 0.0
    %184 = vmatpush1.xpose.msra.mxu0 0.0
    %185 = vmatprep.subr.mxu0 0.0
    %186 = vmatpush1.xpose.msra.mxu0 0.0
    %187 = vmatprep.subr.mxu0 0.0
    %188 = vmatpush1.xpose.msra.mxu0 0.0
    %189 = vmatprep.subr.mxu0 0.0
    %190 = vmatpush1.xpose.msra.mxu0 0.0
    %191 = vmatprep.subr.mxu0 0.0
    %192 = vmatpush1.xpose.msra.mxu0 0.0
    %193 = vmatprep.subr.mxu0 0.0
    %194 = vmatpush1.xpose.msra.mxu0 0.0
    %195 = vmatprep.subr.mxu0 0.0
    %196 = vmatpush1.xpose.msra.mxu0 0.0
    %197 = vmatprep.subr.mxu0 0.0
    %198 = vmatpush1.xpose.msra.mxu0 0.0
    %199 = vmatprep.subr.mxu0 0.0
    %200 = vmatpush1.xpose.msra.mxu0 0.0
    %201 = vmatprep.subr.mxu0 0.0
    %202 = vmatpush1.xpose.msra.mxu0 0.0
    %203 = vmatprep.subr.mxu0 0.0
    %204 = vmatpush1.xpose.msra.mxu0 0.0
    %205 = vmatprep.subr.mxu0 0.0
    %206 = vmatpush1.xpose.msra.mxu0 0.0
    %207 = vmatprep.subr.mxu0 0.0
    %208 = vmatpush1.xpose.msra.mxu0 0.0
    %209 = vmatprep.subr.mxu0 0.0
    %210 = vmatpush1.xpose.msra.mxu0 0.0
    %211 = vmatprep.subr.mxu0 0.0
    %212 = vmatpush1.xpose.msra.mxu0 0.0
    %213 = vmatprep.subr.mxu0 0.0
    %214 = vmatpush1.xpose.msra.mxu0 0.0
    %215 = vmatprep.subr.mxu0 0.0
    %216 = vmatpush1.xpose.msra.mxu0 0.0
    %217 = vmatprep.subr.mxu0 0.0
    %218 = vmatpush1.xpose.msra.mxu0 0.0
    %219 = vmatprep.mubr.f32.mxu0 0.0
    %220 = vmatmul.mubr.f32.gmra.mrb[0].mxu0 %v153
    %v221 = vpop.f32.mrb[0].mxu0
    %v222 = vadd.f32 %v63, %v221
    %v223 = vpop.f32.mrb[0].mxu0
    %224 = vdwg.mxu0
    %v225 = vtanh.pop %v149
    %v226 = vtanh.pop %v222
    %v227 = vld [vmem:[%s3] sm:$0x1]
    %v229 = vlaneseq
    %v230 = vshrl.u32 %v229, 7
    %v231 = vsub.s32 0, %v230
    %v232 = vrot.slane %v227, %v231
    %v234 = vmul.f32 %v225, %v232
    %v235 = vmul.f32 %v226, %v232
    %v236 = vsel %vm66, %v234, 0.0
    %237 = vadd.xlane.f32.xlu0 %v236
    %v238 = vpop.xlane.xlu0 %237
    %v239 = vsel %vm66, %v235, 0.0
    %240 = vadd.xlane.f32.xlu0 %v239
    %v241 = vpop.xlane.xlu0 %240
    %v244 = vlaneseq
    %v245 = vand.u32 %v244, 127
    %v246 = vlaneseq
    %v247 = vshrl.u32 %v246, 7
    %v248 = vsub.s32 %v245, %v247
    %v249 = vrot.slane %v238, %v248
    %v250 = vlaneseq
    %v251 = vshrl.u32 %v250, 7
    %v252 = vsub.s32 %v245, %v251
    %v253 = vrot.slane %v241, %v252
    %vm254 = vcmask 1041409
    %v255 = vsel %vm254, %v253, %v249
    %vm257 = vcmask 58368
    %v258 = vsel %vm257, %v255, -inf
    %259 = vmax.xlane.f32.xlu0 %v258
    %v260 = vpop.xlane.xlu0 %259
    %v262 = vlaneseq
    %v263 = vshrl.u32 %v262, 7
    %v264 = vsub.s32 0, %v263
    %v265 = vrot.slane %v260, %v264
    %v266 = vlaneseq
    %v267 = vshrl.u32 %v266, 7
    %v268 = vsub.s32 1, %v267
    %v269 = vrot.slane %v260, %v268
    %v272 = vsub.f32 %v238, %v265
    %v273 = vsub.f32 %v241, %v269
    %v274 = vmul.f32 %v272, 1.442695
    %v275 = vpow.pop %v274
    %v276 = vmul.f32 %v273, 1.442695
    %v277 = vpow.pop %v276
    %280 = vset.pattern.permute.xlu0 0
    %281 = vperm.xlu0 %280, %v275
    %v282 = vpop.permute.xlu0 %281
    %283 = vset.pattern.permute.xlu0 0
    %284 = vperm.xlu0 %283, %v277
    %v285 = vpop.permute.xlu0 %284
    %v286 = vlaneseq
    %v287 = vshrl.u32 %v286, 7
    %v288 = vsub.s32 %v245, %v287
    %v289 = vrot.slane %v282, %v288
    %v290 = vlaneseq
    %v291 = vshrl.u32 %v290, 7
    %v292 = vsub.s32 %v245, %v291
    %v293 = vrot.slane %v285, %v292
    %v294 = vsel %vm254, %v293, %v289
    %v296 = vsel %vm257, %v294, 0.0
    %297 = vadd.xlane.f32.xlu0 %v296
    %v298 = vpop.xlane.xlu0 %297
    %v300 = vlaneseq
    %v301 = vshrl.u32 %v300, 7
    %v302 = vsub.s32 0, %v301
    %v303 = vrot.slane %v298, %v302
    %v304 = vlaneseq
    %v305 = vshrl.u32 %v304, 7
    %v306 = vsub.s32 1, %v305
    %v307 = vrot.slane %v298, %v306
    %v310 = vrcp.pop %v303
    %v311 = vmul.f32 %v275, %v310
    %v312 = vrcp.pop %v307
    %v313 = vmul.f32 %v277, %v312
    %316 = vset.pattern.permute.xlu0 0
    %317 = vperm.xlu0 %316, %v311
    %v318 = vpop.permute.xlu0 %317
    %319 = vset.pattern.permute.xlu0 0
    %320 = vperm.xlu0 %319, %v313
    %v321 = vpop.permute.xlu0 %320
    %v322 = vlaneseq
    %v323 = vshrl.u32 %v322, 7
    %v324 = vsub.s32 %v245, %v323
    %v325 = vrot.slane %v318, %v324
    %v326 = vlaneseq
    %v327 = vshrl.u32 %v326, 7
    %v328 = vsub.s32 %v245, %v327
    %v329 = vrot.slane %v321, %v328
    %v330 = vsel %vm254, %v329, %v325
    %332 = vst.msk [vmem:[#allocation7] sm:$0x3] %vm257, %v330
    // Predicated region
    $region26: #{tpu_custom_call.1} parent=1 // pred_check
      _
    $region27: #{tpu_custom_call.1} parent=1 // pred_check_branch
      %334 = sbr.rel (0) target = $region29
    $region28: #{tpu_custom_call.1} parent=1 // pred_region
      %s336 = ssub.s32 32, 32
      %337 = vsyncadd [#allocation4], %s336
      %s339 = sshll.u32 [#allocation7], 4
      %s340 = int_to_ptr.vmem [resolvable:$true] %s339
      %342 = dma.vmem_to_hbm [thread:$0]  %s340, 32, %s4, [#allocation4]
    $region29: #{tpu_custom_call.1} parent=1 // pred_fallthru
      _
    // Predicated region
    $region30: #{tpu_custom_call.1} parent=1 // pred_check
      _
    $region31: #{tpu_custom_call.1} parent=1 // pred_check_branch
      %344 = sbr.rel (0) target = $region33
    $region32: #{tpu_custom_call.1} parent=1 // pred_region
      %345 = dma.done [#allocation4], 32
    $region33: #{tpu_custom_call.1} parent=1 // pred_fallthru
      _
    %346 = vsyncpa [#allocation3], 1
    %347 = vsyncpa [#allocation6], 1
    %348 = vsyncpa [#allocation4], 1

</llo_original>
